<compile_context>
chip_gen: v6e
topology: v6e:2x2x1
jax: 0.10.0
libtpu: 0.0.40
codegen_flags: <defaults>
</compile_context>

<pallas_src>
import functools

import numpy as np
import jax
import jax.numpy as jnp
from jax import lax
from jax.experimental import pallas as pl
from jax.experimental.pallas import tpu as pltpu


# --------------------------------------------------------------------------
# Small helpers / per-generation budgets
# --------------------------------------------------------------------------
def _round_up(a, b):
    return (a + b - 1) // b * b


def _cdiv(a, b):
    return -(-a // b)


def _vmem_limit_bytes():
    """Scoped-VMEM budget per TPU generation (conservative fallback = v7x)."""
    cap = 0
    try:
        cap = int(getattr(pltpu.get_tpu_info(), "vmem_capacity_bytes", 0) or 0)
    except Exception:
        cap = 0
    if cap >= 96 * 1024 * 1024:          # v5e / v6e: 128 MiB physical VMEM
        return 64 * 1024 * 1024
    return 40 * 1024 * 1024              # v7x (64 MiB physical) or unknown


_VMEM_LIMIT = _vmem_limit_bytes()
_FUSE_MAX_BYTES = 1 << 20                # <= 1 MiB/input: single fused kernel


# --------------------------------------------------------------------------
# Kernel building blocks
# --------------------------------------------------------------------------
def _block_sq_sum(x_ref, t_ref, rows, block_rows):
    """(1,1) sum of squared diffs for this (block_rows, lane) tile, tail-masked."""
    d = x_ref[...].astype(jnp.float32) - t_ref[...].astype(jnp.float32)
    sq = d * d
    if rows % block_rows != 0:
        # Only the last grid block has a ragged tail; compare/select is free
        # filler under the DMA that bounds this kernel.
        valid = rows - pl.program_id(0) * block_rows
        ridx = lax.broadcasted_iota(jnp.int32, sq.shape, 0)
        sq = jnp.where(ridx < valid, sq, 0.0)
    return jnp.sum(sq, keepdims=True)          # (1, 1)


def _distill_finalize(msum, s, ei, ej, c, loss_ref, sd_ref, mse_ref, newc_ref):
    """Teacher softmax, student log-softmax, combined loss, center EMA (runs once)."""
    inv_student = s[:, 0:1]
    inv_teacher = s[:, 1:2]
    p           = s[:, 2:3]
    momentum    = s[:, 3:4]
    inv_batch   = s[:, 4:5]
    inv_n       = s[:, 5:6]

    mse = msum * inv_n                                            # (1, 1)

    cf = c.astype(jnp.float32)                                    # (1, D)
    tl = (ej.astype(jnp.float32) - cf) * inv_teacher              # (B, D)
    tl = tl - jnp.max(tl, axis=-1, keepdims=True)
    te = jnp.exp(tl)
    teacher = te / jnp.sum(te, axis=-1, keepdims=True)            # exact divide

    sl = ei.astype(jnp.float32) * inv_student
    sl = sl - jnp.max(sl, axis=-1, keepdims=True)
    lsm = sl - jnp.log(jnp.sum(jnp.exp(sl), axis=-1, keepdims=True))

    sd = jnp.sum(-teacher * lsm, keepdims=True) * inv_batch       # (1, 1)

    loss_ref[...] = p * sd + (1.0 - p) * mse
    sd_ref[...]   = sd
    mse_ref[...]  = mse

    # TODO(synk): multi-device training needs an all-reduce (lax.psum / remote
    # DMA) of batch_center here; world_size is treated as 1.
    batch_center = jnp.sum(teacher, axis=0, keepdims=True) * inv_batch
    newc_ref[...] = cf * momentum + batch_center * (1.0 - momentum)


# ---------------- split path: tiled partial sums + tiny finalize ----------
def _mse_partial_kernel(x_ref, t_ref, part_ref, *, rows, block_rows):
    part_ref[...] = jnp.reshape(_block_sq_sum(x_ref, t_ref, rows, block_rows),
                                (1, 1, 1))


def _finalize_kernel(part_ref, s_ref, ei_ref, ej_ref, c_ref,
                     loss_ref, sd_ref, mse_ref, newc_ref):
    msum = jnp.sum(part_ref[...], axis=0)            # (nblocks,1,1) -> (1,1)
    _distill_finalize(msum, s_ref[...], ei_ref[...], ej_ref[...], c_ref[...],
                      loss_ref, sd_ref, mse_ref, newc_ref)


# ---------------- fused path: one launch for small inputs -----------------
def _fused_kernel(x_ref, t_ref, s_ref, ei_ref, ej_ref, c_ref,
                  loss_ref, sd_ref, mse_ref, newc_ref, acc_ref,
                  *, rows, block_rows):
    i = pl.program_id(0)

    @pl.when(i == 0)
    def _init():
        acc_ref[...] = jnp.zeros_like(acc_ref)

    acc_ref[...] += _block_sq_sum(x_ref, t_ref, rows, block_rows)

    @pl.when(i == pl.num_programs(0) - 1)
    def _finish():
        _distill_finalize(acc_ref[...], s_ref[...], ei_ref[...], ej_ref[...],
                          c_ref[...], loss_ref, sd_ref, mse_ref, newc_ref)


# --------------------------------------------------------------------------
# Functional forward (one jit dispatch)
# --------------------------------------------------------------------------
@jax.jit
def _forward(x, target, emb_i, emb_j, center, scalars):
    total = int(np.prod(x.shape))
    itemsize = int(x.dtype.itemsize)
    B, out_dim = emb_i.shape

    xf = x.reshape(-1)
    tf = target.reshape(-1)

    lane = next((c for c in (512, 256, 128) if total % c == 0), None)
    if lane is None:
        # TODO(synk): rare fallback — lane-granular in-kernel masking would
        # avoid this extra copy for totals not divisible by 128.
        lane = 128
        padded = _round_up(total, lane)
        xf = jnp.pad(xf, (0, padded - total))
        tf = jnp.pad(tf, (0, padded - total))
        total_elems = padded
    else:
        total_elems = total

    rows = total_elems // lane
    x2d = xf.reshape(rows, lane)
    t2d = tf.reshape(rows, lane)

    # Tile sizing: 2 inputs x 2 pipeline buffers (native dtype) + ~2 f32
    # temporaries of the tile must stay inside ~75% of the scoped-VMEM budget.
    per_row_live = 4 * lane * itemsize + 2 * lane * 4
    budget_rows = max(8, (int(0.75 * _VMEM_LIMIT) // per_row_live) // 8 * 8)

    out_shapes = (jax.ShapeDtypeStruct((1, 1), jnp.float32),          # loss
                  jax.ShapeDtypeStruct((1, 1), jnp.float32),          # loss_selfdis
                  jax.ShapeDtypeStruct((1, 1), jnp.float32),          # loss_mse
                  jax.ShapeDtypeStruct((1, out_dim), jnp.float32))    # new center

    if total_elems * itemsize <= _FUSE_MAX_BYTES:
        # ---- small input: single fused kernel (launch-latency bound) ----
        block_rows = min(rows, budget_rows)
        nblocks = _cdiv(rows, block_rows)
        loss, sd, mse, new_center = pl.pallas_call(
            functools.partial(_fused_kernel, rows=rows, block_rows=block_rows),
            out_shape=out_shapes,
            grid=(nblocks,),
            in_specs=[pl.BlockSpec((block_rows, lane), lambda i: (i, 0)),
                      pl.BlockSpec((block_rows, lane), lambda i: (i, 0)),
                      pl.BlockSpec((1, 8), lambda i: (0, 0)),
                      pl.BlockSpec((B, out_dim), lambda i: (0, 0)),
                      pl.BlockSpec((B, out_dim), lambda i: (0, 0)),
                      pl.BlockSpec((1, out_dim), lambda i: (0, 0))],
            out_specs=(pl.BlockSpec((1, 1), lambda i: (0, 0)),
                       pl.BlockSpec((1, 1), lambda i: (0, 0)),
                       pl.BlockSpec((1, 1), lambda i: (0, 0)),
                       pl.BlockSpec((1, out_dim), lambda i: (0, 0))),
            scratch_shapes=[pltpu.VMEM((1, 1), jnp.float32)],
            compiler_params=pltpu.CompilerParams(
                dimension_semantics=("arbitrary",),
                vmem_limit_bytes=_VMEM_LIMIT),
            cost_estimate=pl.CostEstimate(
                flops=int(3 * total + 12 * B * out_dim),
                transcendentals=int(2 * B * out_dim),
                bytes_accessed=int(2 * total * itemsize + 3 * B * out_dim * 4)),
        )(x2d, t2d, scalars, emb_i, emb_j, center)
    else:
        # ---- large input: tiled, pipelined, megacore-parallel partial sums ----
        block_rows = budget_rows
        if _cdiv(rows, block_rows) < 2:
            # >= 2 blocks so both v7x TensorCores get work (harmless elsewhere).
            block_rows = _round_up(_cdiv(rows, 2), 8)
        nblocks = _cdiv(rows, block_rows)

        partials = pl.pallas_call(
            functools.partial(_mse_partial_kernel, rows=rows, block_rows=block_rows),
            out_shape=jax.ShapeDtypeStruct((nblocks, 1, 1), jnp.float32),
            grid=(nblocks,),
            in_specs=[pl.BlockSpec((block_rows, lane), lambda i: (i, 0)),
                      pl.BlockSpec((block_rows, lane), lambda i: (i, 0))],
            out_specs=pl.BlockSpec((1, 1, 1), lambda i: (i, 0, 0)),
            compiler_params=pltpu.CompilerParams(
                dimension_semantics=("parallel",),
                vmem_limit_bytes=_VMEM_LIMIT),
            cost_estimate=pl.CostEstimate(
                flops=int(3 * total), transcendentals=0,
                bytes_accessed=int(2 * total * itemsize + nblocks * 4)),
        )(x2d, t2d)

        loss, sd, mse, new_center = pl.pallas_call(
            _finalize_kernel,
            out_shape=out_shapes,
            in_specs=[pl.BlockSpec(memory_space=pltpu.MemorySpace.VMEM)] * 5,
            out_specs=(pl.BlockSpec(memory_space=pltpu.MemorySpace.VMEM),) * 4,
            compiler_params=pltpu.CompilerParams(vmem_limit_bytes=_VMEM_LIMIT),
        )(partials, scalars, emb_i, emb_j, center)

    return loss[0, 0], sd[0, 0], mse[0, 0], new_center


# --------------------------------------------------------------------------
# Module wrapper (forward-pass semantics of the PyTorch nn.Module)
# --------------------------------------------------------------------------
class SelfDistillationAndMSELoss:
    def __init__(self, out_dim, teacher_temp, nepochs, warmup_teacher_temp_epochs,
                 warmup_teacher_temp, p=0.5, student_temp=0.1, center_momentum=0.9):
        self.p = float(p)
        self.student_temp = float(student_temp)
        self.center_momentum = float(center_momentum)
        self.center = jnp.zeros((1, out_dim), jnp.float32)
        self.teacher_temp_schedule = np.concatenate((
            np.linspace(warmup_teacher_temp, teacher_temp, warmup_teacher_temp_epochs),
            np.ones(nepochs - warmup_teacher_temp_epochs) * teacher_temp))

    def __call__(self, inp, target, emb_i, emb_j, epoch):
        temp = float(self.teacher_temp_schedule[epoch])       # host-side schedule lookup
        n_elems = float(np.prod(inp.shape))
        batch = float(emb_i.shape[0])
        scalars = jnp.array([[1.0 / self.student_temp, 1.0 / temp, self.p,
                              self.center_momentum, 1.0 / batch, 1.0 / n_elems,
                              0.0, 0.0]], jnp.float32)
        loss, sd, mse, new_center = _forward(inp, target, emb_i, emb_j,
                                             self.center, scalars)
        self.center = new_center      # functional analogue of the torch buffer update
        return loss, sd, mse


# --------------------------------------------------------------------------
# Pure-JAX reference for verification
# --------------------------------------------------------------------------
def _reference(x, target, emb_i, emb_j, center, temp, student_temp, p, momentum):
    mse = jnp.mean((x - target) ** 2)
    teacher = jax.nn.softmax((emb_j - center) / temp, axis=-1)
    lsm = jax.nn.log_softmax(emb_i / student_temp, axis=-1)
    sd = jnp.mean(jnp.sum(-teacher * lsm, axis=-1))
    loss = p * sd + (1.0 - p) * mse
    bc = jnp.sum(teacher, axis=0, keepdims=True) / emb_i.shape[0]
    new_center = center * momentum + bc * (1.0 - momentum)
    return loss, sd, mse, new_center


if __name__ == "__main__":
    key = jax.random.PRNGKey(0)
    ks = jax.random.split(key, 8)

    # ---------- small case: fused single-kernel path ----------
    N, C, H, W = 2, 4, 16, 16
    B, OUT_DIM = 8, 128
    x  = jax.random.normal(ks[0], (N, C, H, W), jnp.float32)
    tg = jax.random.normal(ks[1], (N, C, H, W), jnp.float32)
    ei = jax.random.normal(ks[2], (B, OUT_DIM), jnp.float32)
    ej = jax.random.normal(ks[3], (B, OUT_DIM), jnp.float32)

    mod = SelfDistillationAndMSELoss(
        out_dim=OUT_DIM, teacher_temp=0.07, nepochs=10,
        warmup_teacher_temp_epochs=3, warmup_teacher_temp=0.04,
        p=0.5, student_temp=0.1, center_momentum=0.9)

    loss, sd, mse = mod(x, tg, ei, ej, epoch=1)
    jax.block_until_ready((loss, sd, mse, mod.center))

    temp = float(mod.teacher_temp_schedule[1])
    r_loss, r_sd, r_mse, r_center = _reference(
        x, tg, ei, ej, jnp.zeros((1, OUT_DIM), jnp.float32), temp, 0.1, 0.5, 0.9)
    assert jnp.allclose(mse, r_mse, rtol=1e-4, atol=1e-6), (mse, r_mse)
    assert jnp.allclose(sd, r_sd, rtol=1e-5, atol=1e-5), (sd, r_sd)
    assert jnp.allclose(loss, r_loss, rtol=1e-5, atol=1e-5), (loss, r_loss)
    assert jnp.allclose(mod.center, r_center, rtol=1e-5, atol=1e-6)

    # ---------- larger, row-misaligned case: split path + tail masking ----------
    N2, C2, H2, W2 = 69, 4, 32, 32         # 282624 elems -> 552 rows of 512 (ragged split)
    B2, D2 = 16, 256
    x2  = jax.random.normal(ks[4], (N2, C2, H2, W2), jnp.float32)
    tg2 = jax.random.normal(ks[5], (N2, C2, H2, W2), jnp.float32)
    ei2 = jax.random.normal(ks[6], (B2, D2), jnp.float32)
    ej2 = jax.random.normal(ks[7], (B2, D2), jnp.float32)

    mod2 = SelfDistillationAndMSELoss(
        out_dim=D2, teacher_temp=0.07, nepochs=10,
        warmup_teacher_temp_epochs=3, warmup_teacher_temp=0.04,
        p=0.3, student_temp=0.1, center_momentum=0.9)

    loss2, sd2, mse2 = mod2(x2, tg2, ei2, ej2, epoch=5)
    jax.block_until_ready((loss2, sd2, mse2, mod2.center))

    temp2 = float(mod2.teacher_temp_schedule[5])
    r_loss2, r_sd2, r_mse2, r_center2 = _reference(
        x2, tg2, ei2, ej2, jnp.zeros((1, D2), jnp.float32), temp2, 0.1, 0.3, 0.9)
    assert jnp.allclose(mse2, r_mse2, rtol=1e-4, atol=1e-6), (mse2, r_mse2)
    assert jnp.allclose(sd2, r_sd2, rtol=1e-5, atol=1e-5), (sd2, r_sd2)
    assert jnp.allclose(loss2, r_loss2, rtol=1e-5, atol=1e-5), (loss2, r_loss2)
    assert jnp.allclose(mod2.center, r_center2, rtol=1e-5, atol=1e-6)

    print("KERNEL_OK")
</pallas_src>

<mosaic_0001>
module attributes {stable_mosaic.version = 11 : i64} {
  func.func @_fused_kernel(%arg0: i32, %arg1: memref<4x512xf32, #tpu.memory_space<vmem>>, %arg2: memref<4x512xf32, #tpu.memory_space<vmem>>, %arg3: memref<1x8xf32, #tpu.memory_space<vmem>>, %arg4: memref<8x128xf32, #tpu.memory_space<vmem>>, %arg5: memref<8x128xf32, #tpu.memory_space<vmem>>, %arg6: memref<1x128xf32, #tpu.memory_space<vmem>>, %arg7: memref<1x1xf32, #tpu.memory_space<vmem>>, %arg8: memref<1x1xf32, #tpu.memory_space<vmem>>, %arg9: memref<1x1xf32, #tpu.memory_space<vmem>>, %arg10: memref<1x128xf32, #tpu.memory_space<vmem>>, %arg11: memref<1x1xf32, #tpu.memory_space<vmem>>) attributes {dimension_semantics = [#tpu.dimension_semantics<arbitrary>], iteration_bounds = array<i64: 1>, scalar_prefetch = 0 : i64, scratch_operands = 1 : i64, tpu.core_type = #tpu.core_type<tc>, window_params = [{transform_indices = @transform_0, window_bounds = array<i64: 4, 512>}, {transform_indices = @transform_1, window_bounds = array<i64: 4, 512>}, {pipeline_mode = #tpu.pipeline_mode<synchronous>, transform_indices = @transform_2, window_bounds = array<i64: 1, 8>}, {pipeline_mode = #tpu.pipeline_mode<synchronous>, transform_indices = @transform_3, window_bounds = array<i64: 8, 128>}, {pipeline_mode = #tpu.pipeline_mode<synchronous>, transform_indices = @transform_4, window_bounds = array<i64: 8, 128>}, {pipeline_mode = #tpu.pipeline_mode<synchronous>, transform_indices = @transform_5, window_bounds = array<i64: 1, 128>}, {pipeline_mode = #tpu.pipeline_mode<synchronous>, transform_indices = @transform_6, window_bounds = array<i64: 1, 1>}, {pipeline_mode = #tpu.pipeline_mode<synchronous>, transform_indices = @transform_7, window_bounds = array<i64: 1, 1>}, {pipeline_mode = #tpu.pipeline_mode<synchronous>, transform_indices = @transform_8, window_bounds = array<i64: 1, 1>}, {pipeline_mode = #tpu.pipeline_mode<synchronous>, transform_indices = @transform_9, window_bounds = array<i64: 1, 128>}]} {
    %c0_i32 = arith.constant 0 : i32
    %0 = arith.cmpi eq, %arg0, %c0_i32 : i32
    %1 = arith.extui %0 : i1 to i32
    %c0_i32_0 = arith.constant 0 : i32
    %2 = arith.cmpi ne, %1, %c0_i32_0 : i32
    scf.if %2 {
      %cst_10 = arith.constant 0.000000e+00 : f32
      %18 = vector.broadcast %cst_10 : f32 to vector<1x1xf32>
      %c0_11 = arith.constant 0 : index
      %c0_12 = arith.constant 0 : index
      %19 = vector.load %arg11[%c0_11, %c0_12] : memref<1x1xf32, #tpu.memory_space<vmem>>, vector<1x1xf32>
      tpu.vector_store %arg11[%c0_11, %c0_12], %18 {strides = array<i32>} : memref<1x1xf32, #tpu.memory_space<vmem>>, vector<1x1xf32>,
    } else {
    }
    %c0 = arith.constant 0 : index
    %c0_1 = arith.constant 0 : index
    %3 = vector.load %arg11[%c0, %c0_1] : memref<1x1xf32, #tpu.memory_space<vmem>>, vector<1x1xf32>
    %c0_2 = arith.constant 0 : index
    %c0_3 = arith.constant 0 : index
    %4 = vector.load %arg1[%c0_2, %c0_3] : memref<4x512xf32, #tpu.memory_space<vmem>>, vector<4x512xf32>
    %c0_4 = arith.constant 0 : index
    %c0_5 = arith.constant 0 : index
    %5 = vector.load %arg2[%c0_4, %c0_5] : memref<4x512xf32, #tpu.memory_space<vmem>>, vector<4x512xf32>
    %6 = arith.subf %4, %5 : vector<4x512xf32>
    %7 = arith.mulf %6, %6 : vector<4x512xf32>
    %8 = vector.shape_cast %7 : vector<4x512xf32> to vector<1x4x512xf32>
    %cst = arith.constant dense<0.000000e+00> : vector<1xf32>
    %9 = vector.multi_reduction <add>, %8, %cst [1, 2] : vector<1x4x512xf32> to vector<1xf32>
    %10 = vector.shape_cast %9 : vector<1xf32> to vector<1x1x1xf32>
    %11 = vector.extract %10[0, 0, 0] : f32 from vector<1x1x1xf32>
    %12 = vector.broadcast %11 : f32 to vector<1x1xf32>
    %13 = arith.addf %3, %12 : vector<1x1xf32>
    %c0_6 = arith.constant 0 : index
    %c0_7 = arith.constant 0 : index
    %14 = vector.load %arg11[%c0_6, %c0_7] : memref<1x1xf32, #tpu.memory_space<vmem>>, vector<1x1xf32>
    tpu.vector_store %arg11[%c0_6, %c0_7], %13 {strides = array<i32>} : memref<1x1xf32, #tpu.memory_space<vmem>>, vector<1x1xf32>,
    %c0_i32_8 = arith.constant 0 : i32
    %15 = arith.cmpi eq, %arg0, %c0_i32_8 : i32
    %16 = arith.extui %15 : i1 to i32
    %c0_i32_9 = arith.constant 0 : i32
    %17 = arith.cmpi ne, %16, %c0_i32_9 : i32
    scf.if %17 {
      %c0_10 = arith.constant 0 : index
      %c0_11 = arith.constant 0 : index
      %18 = vector.load %arg11[%c0_10, %c0_11] : memref<1x1xf32, #tpu.memory_space<vmem>>, vector<1x1xf32>
      %c0_12 = arith.constant 0 : index
      %c0_13 = arith.constant 0 : index
      %19 = vector.load %arg3[%c0_12, %c0_13] : memref<1x8xf32, #tpu.memory_space<vmem>>, vector<1x8xf32>
      %c0_14 = arith.constant 0 : index
      %c0_15 = arith.constant 0 : index
      %20 = vector.load %arg4[%c0_14, %c0_15] : memref<8x128xf32, #tpu.memory_space<vmem>>, vector<8x128xf32>
      %c0_16 = arith.constant 0 : index
      %c0_17 = arith.constant 0 : index
      %21 = vector.load %arg5[%c0_16, %c0_17] : memref<8x128xf32, #tpu.memory_space<vmem>>, vector<8x128xf32>
      %c0_18 = arith.constant 0 : index
      %c0_19 = arith.constant 0 : index
      %22 = vector.load %arg6[%c0_18, %c0_19] : memref<1x128xf32, #tpu.memory_space<vmem>>, vector<1x128xf32>
      %23 = vector.extract_strided_slice %19 {offsets = [0, 0], sizes = [1, 1], strides = [1, 1]} : vector<1x8xf32> to vector<1x1xf32>
      %24 = vector.extract_strided_slice %19 {offsets = [0, 1], sizes = [1, 1], strides = [1, 1]} : vector<1x8xf32> to vector<1x1xf32>
      %25 = vector.extract_strided_slice %19 {offsets = [0, 2], sizes = [1, 1], strides = [1, 1]} : vector<1x8xf32> to vector<1x1xf32>
      %26 = vector.extract_strided_slice %19 {offsets = [0, 3], sizes = [1, 1], strides = [1, 1]} : vector<1x8xf32> to vector<1x1xf32>
      %27 = vector.extract_strided_slice %19 {offsets = [0, 4], sizes = [1, 1], strides = [1, 1]} : vector<1x8xf32> to vector<1x1xf32>
      %28 = vector.extract_strided_slice %19 {offsets = [0, 5], sizes = [1, 1], strides = [1, 1]} : vector<1x8xf32> to vector<1x1xf32>
      %29 = arith.mulf %18, %28 : vector<1x1xf32>
      %30 = vector.broadcast %22 : vector<1x128xf32> to vector<8x128xf32>
      %31 = arith.subf %21, %30 : vector<8x128xf32>
      %32 = vector.broadcast %24 : vector<1x1xf32> to vector<8x128xf32>
      %33 = arith.mulf %31, %32 : vector<8x128xf32>
      %cst_20 = arith.constant dense<0xFF800000> : vector<8xf32>
      %34 = vector.multi_reduction <maximumf>, %33, %cst_20 [1] : vector<8x128xf32> to vector<8xf32>
      %35 = vector.shape_cast %34 : vector<8xf32> to vector<8x1xf32>
      %36 = vector.broadcast %35 : vector<8x1xf32> to vector<8x128xf32>
      %37 = arith.subf %33, %36 : vector<8x128xf32>
      %38 = math.exp %37 : vector<8x128xf32>
      %cst_21 = arith.constant dense<0.000000e+00> : vector<8xf32>
      %39 = vector.multi_reduction <add>, %38, %cst_21 [1] : vector<8x128xf32> to vector<8xf32>
      %40 = vector.shape_cast %39 : vector<8xf32> to vector<8x1xf32>
      %41 = vector.broadcast %40 : vector<8x1xf32> to vector<8x128xf32>
      %42 = arith.divf %38, %41 : vector<8x128xf32>
      %43 = vector.broadcast %23 : vector<1x1xf32> to vector<8x128xf32>
      %44 = arith.mulf %20, %43 : vector<8x128xf32>
      %cst_22 = arith.constant dense<0xFF800000> : vector<8xf32>
      %45 = vector.multi_reduction <maximumf>, %44, %cst_22 [1] : vector<8x128xf32> to vector<8xf32>
      %46 = vector.shape_cast %45 : vector<8xf32> to vector<8x1xf32>
      %47 = vector.broadcast %46 : vector<8x1xf32> to vector<8x128xf32>
      %48 = arith.subf %44, %47 : vector<8x128xf32>
      %49 = math.exp %48 : vector<8x128xf32>
      %cst_23 = arith.constant dense<0.000000e+00> : vector<8xf32>
      %50 = vector.multi_reduction <add>, %49, %cst_23 [1] : vector<8x128xf32> to vector<8xf32>
      %51 = vector.shape_cast %50 : vector<8xf32> to vector<8x1xf32>
      %52 = math.log %51 : vector<8x1xf32>
      %53 = vector.broadcast %52 : vector<8x1xf32> to vector<8x128xf32>
      %54 = arith.subf %48, %53 : vector<8x128xf32>
      %cst_24 = arith.constant 0.000000e+00 : f32
      %55 = vector.broadcast %cst_24 : f32 to vector<8x128xf32>
      %56 = arith.subf %55, %42 : vector<8x128xf32>
      %57 = arith.mulf %56, %54 : vector<8x128xf32>
      %58 = vector.shape_cast %57 : vector<8x128xf32> to vector<1x8x128xf32>
      %cst_25 = arith.constant dense<0.000000e+00> : vector<1xf32>
      %59 = vector.multi_reduction <add>, %58, %cst_25 [1, 2] : vector<1x8x128xf32> to vector<1xf32>
      %60 = vector.shape_cast %59 : vector<1xf32> to vector<1x1x1xf32>
      %61 = vector.extract %60[0, 0, 0] : f32 from vector<1x1x1xf32>
      %62 = vector.broadcast %61 : f32 to vector<1x1xf32>
      %63 = arith.mulf %62, %27 : vector<1x1xf32>
      %64 = arith.mulf %25, %63 : vector<1x1xf32>
      %cst_26 = arith.constant 1.000000e+00 : f32
      %65 = vector.broadcast %cst_26 : f32 to vector<1x1xf32>
      %66 = arith.subf %65, %25 : vector<1x1xf32>
      %67 = arith.mulf %66, %29 : vector<1x1xf32>
      %68 = arith.addf %64, %67 : vector<1x1xf32>
      %c0_27 = arith.constant 0 : index
      %c0_28 = arith.constant 0 : index
      %69 = vector.load %arg7[%c0_27, %c0_28] : memref<1x1xf32, #tpu.memory_space<vmem>>, vector<1x1xf32>
      tpu.vector_store %arg7[%c0_27, %c0_28], %68 {strides = array<i32>} : memref<1x1xf32, #tpu.memory_space<vmem>>, vector<1x1xf32>,
      %c0_29 = arith.constant 0 : index
      %c0_30 = arith.constant 0 : index
      %70 = vector.load %arg8[%c0_29, %c0_30] : memref<1x1xf32, #tpu.memory_space<vmem>>, vector<1x1xf32>
      tpu.vector_store %arg8[%c0_29, %c0_30], %63 {strides = array<i32>} : memref<1x1xf32, #tpu.memory_space<vmem>>, vector<1x1xf32>,
      %c0_31 = arith.constant 0 : index
      %c0_32 = arith.constant 0 : index
      %71 = vector.load %arg9[%c0_31, %c0_32] : memref<1x1xf32, #tpu.memory_space<vmem>>, vector<1x1xf32>
      tpu.vector_store %arg9[%c0_31, %c0_32], %29 {strides = array<i32>} : memref<1x1xf32, #tpu.memory_space<vmem>>, vector<1x1xf32>,
      %cst_33 = arith.constant dense<0.000000e+00> : vector<128xf32>
      %72 = vector.multi_reduction <add>, %42, %cst_33 [0] : vector<8x128xf32> to vector<128xf32>
      %73 = vector.shape_cast %72 : vector<128xf32> to vector<1x128xf32>
      %74 = vector.broadcast %27 : vector<1x1xf32> to vector<1x128xf32>
      %75 = arith.mulf %73, %74 : vector<1x128xf32>
      %76 = vector.broadcast %26 : vector<1x1xf32> to vector<1x128xf32>
      %77 = arith.mulf %22, %76 : vector<1x128xf32>
      %cst_34 = arith.constant 1.000000e+00 : f32
      %78 = vector.broadcast %cst_34 : f32 to vector<1x1xf32>
      %79 = arith.subf %78, %26 : vector<1x1xf32>
      %80 = vector.broadcast %79 : vector<1x1xf32> to vector<1x128xf32>
      %81 = arith.mulf %75, %80 : vector<1x128xf32>
      %82 = arith.addf %77, %81 : vector<1x128xf32>
      %c0_35 = arith.constant 0 : index
      %c0_36 = arith.constant 0 : index
      %83 = vector.load %arg10[%c0_35, %c0_36] : memref<1x128xf32, #tpu.memory_space<vmem>>, vector<1x128xf32>
      tpu.vector_store %arg10[%c0_35, %c0_36], %82 {strides = array<i32>} : memref<1x128xf32, #tpu.memory_space<vmem>>, vector<1x128xf32>,
    } else {
    }
    return
  }
  func.func @transform_0(%arg0: i32) -> (i32, i32) {
    %c0_i32 = arith.constant 0 : i32
    %c0_i32_0 = arith.constant 0 : i32
    return %arg0, %c0_i32 : i32, i32
  }
  func.func @transform_1(%arg0: i32) -> (i32, i32) {
    %c0_i32 = arith.constant 0 : i32
    %c0_i32_0 = arith.constant 0 : i32
    return %arg0, %c0_i32 : i32, i32
  }
  func.func @transform_2(%arg0: i32) -> (i32, i32) {
    %c0_i32 = arith.constant 0 : i32
    %c0_i32_0 = arith.constant 0 : i32
    %c0_i32_1 = arith.constant 0 : i32
    return %c0_i32, %c0_i32_0 : i32, i32
  }
  func.func @transform_3(%arg0: i32) -> (i32, i32) {
    %c0_i32 = arith.constant 0 : i32
    %c0_i32_0 = arith.constant 0 : i32
    %c0_i32_1 = arith.constant 0 : i32
    return %c0_i32, %c0_i32_0 : i32, i32
  }
  func.func @transform_4(%arg0: i32) -> (i32, i32) {
    %c0_i32 = arith.constant 0 : i32
    %c0_i32_0 = arith.constant 0 : i32
    %c0_i32_1 = arith.constant 0 : i32
    return %c0_i32, %c0_i32_0 : i32, i32
  }
  func.func @transform_5(%arg0: i32) -> (i32, i32) {
    %c0_i32 = arith.constant 0 : i32
    %c0_i32_0 = arith.constant 0 : i32
    %c0_i32_1 = arith.constant 0 : i32
    return %c0_i32, %c0_i32_0 : i32, i32
  }
  func.func @transform_6(%arg0: i32) -> (i32, i32) {
    %c0_i32 = arith.constant 0 : i32
    %c0_i32_0 = arith.constant 0 : i32
    %c0_i32_1 = arith.constant 0 : i32
    return %c0_i32, %c0_i32_0 : i32, i32
  }
  func.func @transform_7(%arg0: i32) -> (i32, i32) {
    %c0_i32 = arith.constant 0 : i32
    %c0_i32_0 = arith.constant 0 : i32
    %c0_i32_1 = arith.constant 0 : i32
    return %c0_i32, %c0_i32_0 : i32, i32
  }
  func.func @transform_8(%arg0: i32) -> (i32, i32) {
    %c0_i32 = arith.constant 0 : i32
    %c0_i32_0 = arith.constant 0 : i32
    %c0_i32_1 = arith.constant 0 : i32
    return %c0_i32, %c0_i32_0 : i32, i32
  }
  func.func @transform_9(%arg0: i32) -> (i32, i32) {
    %c0_i32 = arith.constant 0 : i32
    %c0_i32_0 = arith.constant 0 : i32
    %c0_i32_1 = arith.constant 0 : i32
    return %c0_i32, %c0_i32_0 : i32, i32
  }
}

</mosaic_0001>

<llo_original>
// kernel: _forward.1
$region0: #{_forward.1}
  #allocation0 [shape = 'u32[]', space=smem, size = 0x4, offset = 0x4, fixed_abs, tag = 'smem constant byte address 0x4 - core index']
  #allocation1 [shape = 'u32[144,128]{1,0:T(1,128)}', space=vmem, size = 0x12000, scoped, tag = 'internal scratch']
  #allocation2 [shape = 'f32[1,1]{1,0:T(1,128)}', space=vmem, size = 0x200, scoped, tag = 'scratch operand']
  %s0 = inlined_call_operand.vmem [shape: f32[4,512], index: 0, kind: input, shape index: {}]
  %s1 = inlined_call_operand.vmem [shape: f32[4,512], index: 1, kind: input, shape index: {}]
  %s2 = inlined_call_operand.vmem [shape: f32[1,8], index: 2, kind: input, shape index: {}]
  %s3 = inlined_call_operand.vmem [shape: f32[8,128], index: 3, kind: input, shape index: {}]
  %s4 = inlined_call_operand.vmem [shape: f32[8,128], index: 4, kind: input, shape index: {}]
  %s5 = inlined_call_operand.vmem [shape: f32[1,128], index: 5, kind: input, shape index: {}]
  %s6 = inlined_call_operand.hbm [shape: f32[1,1], index: 6, kind: output, shape index: {0}]
  %s7 = inlined_call_operand.hbm [shape: f32[1,1], index: 7, kind: output, shape index: {1}]
  %s8 = inlined_call_operand.hbm [shape: f32[1,1], index: 8, kind: output, shape index: {2}]
  %s9 = inlined_call_operand.hbm [shape: f32[1,128], index: 9, kind: output, shape index: {3}]
  %10 = xla_tuple %s6, %s7, %s8, %s9
  %s11 = sld [smem:[#allocation0]]
  $region66: #{_forward.1} parent=0
    _
  %s13 = ssub.s32 1, %s11
  %s14 = scalar_select 0, %s13, %s11
  $region1: #{_forward.1} parent=0
    #allocation3 [shape = 'u8[512]{0}', space=vmem, size = 0x400, scoped, tag = 'output window, operand 0, single buffered']
    #allocation4 [shape = 's32[1]{0}', space=sflag, size = 0x4, scoped, tag = 'scoped memory for _forward.1']
    #allocation5 [shape = 'u8[512]{0}', space=vmem, size = 0x400, scoped, tag = 'output window, operand 1, single buffered']
    #allocation6 [shape = 's32[1]{0}', space=sflag, size = 0x4, scoped, tag = 'scoped memory for _forward.1']
    #allocation7 [shape = 'u8[512]{0}', space=vmem, size = 0x400, scoped, tag = 'output window, operand 2, single buffered']
    #allocation8 [shape = 'u8[512]{0}', space=vmem, size = 0x400, scoped, tag = 'output window, operand 3, single buffered']
    #allocation9 [shape = 's32[1]{0}', space=sflag, size = 0x4, scoped, tag = 'scoped memory for _forward.1']
    %15 = vsyncpa [#allocation4], 0
    %16 = vsyncpa [#allocation6], 0
    %17 = vsyncpa [#allocation9], 0
    // Predicated region
    $region2: #{_forward.1} parent=1 // pred_check
      _
    $region3: #{_forward.1} parent=1 // pred_check_branch
      %19 = sbr.rel (0) target = $region5
    $region4: #{_forward.1} parent=1 // pred_region
      _
    $region5: #{_forward.1} parent=1 // pred_fallthru
      _
    // Predicated region
    $region6: #{_forward.1} parent=1 // pred_check
      _
    $region7: #{_forward.1} parent=1 // pred_check_branch
      %21 = sbr.rel (0) target = $region9
    $region8: #{_forward.1} parent=1 // pred_region
      _
    $region9: #{_forward.1} parent=1 // pred_fallthru
      _
    // Predicated region
    $region10: #{_forward.1} parent=1 // pred_check
      _
    $region11: #{_forward.1} parent=1 // pred_check_branch
      %23 = sbr.rel (0) target = $region13
    $region12: #{_forward.1} parent=1 // pred_region
      _
    $region13: #{_forward.1} parent=1 // pred_fallthru
      _
    // Predicated region
    $region14: #{_forward.1} parent=1 // pred_check
      _
    $region15: #{_forward.1} parent=1 // pred_check_branch
      %25 = sbr.rel (0) target = $region17
    $region16: #{_forward.1} parent=1 // pred_region
      _
    $region17: #{_forward.1} parent=1 // pred_fallthru
      _
    // Predicated region
    $region18: #{_forward.1} parent=1 // pred_check
      _
    $region19: #{_forward.1} parent=1 // pred_check_branch
      %27 = sbr.rel (0) target = $region21
    $region20: #{_forward.1} parent=1 // pred_region
      _
    $region21: #{_forward.1} parent=1 // pred_fallthru
      _
    // Predicated region
    $region22: #{_forward.1} parent=1 // pred_check
      _
    $region23: #{_forward.1} parent=1 // pred_check_branch
      %29 = sbr.rel (0) target = $region25
    $region24: #{_forward.1} parent=1 // pred_region
      _
    $region25: #{_forward.1} parent=1 // pred_fallthru
      _
    %p30 = scmp.eq.s32.totalorder 0, 0
    // Predicated region
    $region26: #{_forward.1} parent=1 // pred_check
      %p31 = pneg %p30
    $region27: #{_forward.1} parent=1 // pred_check_branch
      %33 = sbr.rel (%p31) target = $region29
    $region28: #{_forward.1} parent=1 // pred_region
      %vm34 = vcmask 0
      %35 = vst.msk [vmem:[#allocation2] sm:$0x1] %vm34, 0.0
    $region29: #{_forward.1} parent=1 // pred_fallthru
      _
    %v36 = vld [vmem:[#allocation2] sm:$0x1]
    %v37 = vld [vmem:[%s0] sm:$0xff]
    %v38 = vld [vmem:[%s0 + $0x8] sm:$0xff]
    %v39 = vld [vmem:[%s1] sm:$0xff]
    %v40 = vld [vmem:[%s1 + $0x8] sm:$0xff]
    %v41 = vsub.f32 %v37, %v39
    %v42 = vsub.f32 %v38, %v40
    %v43 = vmul.f32 %v41, %v41
    %v44 = vmul.f32 %v42, %v42
    %v47 = vcombine.high %v43, %v43
    %v48 = vcombine.high %v44, %v44
    %vm51 = vcmask 1043456
    %v52 = vsel %vm51, %v43, 0.0
    %v53 = vsel %vm51, %v47, 0.0
    %v54 = vadd.f32 %v52, %v53
    %v55 = vsel %vm51, %v44, 0.0
    %v56 = vadd.f32 %v54, %v55
    %v57 = vsel %vm51, %v48, 0.0
    %v58 = vadd.f32 %v56, %v57
    %59 = vadd.xlane.f32.xlu0 %v58
    %v60 = vpop.xlane.xlu0 %59
    %v61 = vrot.slane %v60, 4
    %v62 = vadd.f32 %v60, %v61
    %v63 = vrot.slane %v62, 2
    %v64 = vadd.f32 %v62, %v63
    %v65 = vrot.slane %v64, 1
    %v66 = vadd.f32 %v64, %v65
    %s67 = vtos %v66
    %v68 = vstv %s67
    %v69 = vadd.f32 %v36, %v68
    %vm70 = vcmask 0
    %71 = vst.msk [vmem:[#allocation2] sm:$0x1] %vm70, %v69
    // Predicated region
    $region30: #{_forward.1} parent=1 // pred_check
      %p72 = pneg %p30
    $region31: #{_forward.1} parent=1 // pred_check_branch
      %74 = sbr.rel (%p72) target = $region33
    $region32: #{_forward.1} parent=1 // pred_region
      %v75 = vld [vmem:[#allocation2] sm:$0x1]
      %v76 = vld [vmem:[%s2] sm:$0x1]
      %v77 = vld [vmem:[%s3] sm:$0xff]
      %v78 = vld [vmem:[%s4] sm:$0xff]
      %v79 = vld [vmem:[%s5] sm:$0x1]
      %81 = vrot.lane.b32.xlu0 %v76, 123
      %v82 = vpop.permute.xlu0 %81
      %v84 = vmul.f32 %v75, %v82
      %v86 = vlaneseq
      %v87 = vshrl.u32 %v86, 7
      %v88 = vsub.s32 0, %v87
      %v89 = vrot.slane %v79, %v88
      %v91 = vsub.f32 %v78, %v89
      %v92 = vlaneseq
      %v93 = vshrl.u32 %v92, 7
      %v94 = vsub.s32 0, %v93
      %v95 = vrot.slane %v76, %v94
      %96 = vset.pattern.permute.xlu0 1
      %97 = vperm.xlu0 %96, %v95
      %v98 = vpop.permute.xlu0 %97
      %v100 = vmul.f32 %v91, %v98
      %101 = vmax.xlane.f32.xlu0 %v100
      %v102 = vpop.xlane.xlu0 %101
      %v103 = vsub.f32 %v100, %v102
      %v104 = vmul.f32 %v103, 1.442695
      %v105 = vpow.pop %v104
      %106 = vadd.xlane.f32.xlu0 %v105
      %v107 = vpop.xlane.xlu0 %106
      %v108 = vrcp.pop %v107
      %v109 = vmul.f32 %v105, %v108
      %110 = vset.pattern.permute.xlu0 0
      %111 = vperm.xlu0 %110, %v95
      %v112 = vpop.permute.xlu0 %111
      %v114 = vmul.f32 %v77, %v112
      %115 = vmax.xlane.f32.xlu0 %v114
      %v116 = vpop.xlane.xlu0 %115
      %v117 = vsub.f32 %v114, %v116
      %v118 = vmul.f32 %v117, 1.442695
      %v119 = vpow.pop %v118
      %120 = vadd.xlane.f32.xlu0 %v119
      %v121 = vpop.xlane.xlu0 %120
      %v122 = vlog2.pop %v121
      %v123 = vmul.f32 %v122, 0.6931472
      %v124 = vsub.f32 %v117, %v123
      %v125 = vsub.f32 0.0, %v109
      %v126 = vmul.f32 %v125, %v124
      %127 = vadd.xlane.f32.xlu0 %v126
      %v128 = vpop.xlane.xlu0 %127
      %v129 = vrot.slane %v128, 4
      %v130 = vadd.f32 %v128, %v129
      %v131 = vrot.slane %v130, 2
      %v132 = vadd.f32 %v130, %v131
      %v133 = vrot.slane %v132, 1
      %v134 = vadd.f32 %v132, %v133
      %s135 = vtos %v134
      %v136 = vstv %s135
      %v137 = vmul.f32 %v136, %v76
      %139 = vrot.lane.b32.xlu0 %v137, 126
      %v140 = vpop.permute.xlu0 %139
      %v142 = vmul.f32 %v76, %v140
      %v143 = vsub.f32 1.0, %v76
      %145 = vrot.lane.b32.xlu0 %v84, 2
      %v146 = vpop.permute.xlu0 %145
      %v148 = vmul.f32 %v143, %v146
      %v149 = vadd.f32 %v142, %v148
      %v151 = vlaneseq
      %v152 = vshrl.u32 %v151, 7
      %v153 = vsub.s32 0, %v152
      %v154 = vrot.slane %v149, %v153
      %155 = vrot.lane.b32.xlu0 %v154, 126
      %v156 = vpop.permute.xlu0 %155
      %158 = vst.msk [vmem:[#allocation3] sm:$0x1] %vm70, %v156
      %v159 = vlaneseq
      %v160 = vshrl.u32 %v159, 7
      %v161 = vsub.s32 0, %v160
      %v162 = vrot.slane %v137, %v161
      %163 = vrot.lane.b32.xlu0 %v162, 124
      %v164 = vpop.permute.xlu0 %163
      %166 = vst.msk [vmem:[#allocation5] sm:$0x1] %vm70, %v164
      %167 = vst.msk [vmem:[#allocation7] sm:$0x1] %vm70, %v84
      %v168 = vrot.slane %v109, 4
      %v169 = vadd.f32 %v109, %v168
      %v170 = vrot.slane %v169, 2
      %v171 = vadd.f32 %v169, %v170
      %v172 = vrot.slane %v171, 1
      %v173 = vadd.f32 %v171, %v172
      %174 = vset.pattern.permute.xlu0 4
      %175 = vperm.xlu0 %174, %v76
      %v176 = vpop.permute.xlu0 %175
      %v178 = vlaneseq
      %v179 = vshrl.u32 %v178, 7
      %v180 = vsub.s32 0, %v179
      %v181 = vrot.slane %v176, %v180
      %v182 = vmul.f32 %v173, %v181
      %183 = vset.pattern.permute.xlu0 3
      %184 = vperm.xlu0 %183, %v76
      %v185 = vpop.permute.xlu0 %184
      %v187 = vlaneseq
      %v188 = vshrl.u32 %v187, 7
      %v189 = vsub.s32 0, %v188
      %v190 = vrot.slane %v185, %v189
      %v191 = vmul.f32 %v79, %v190
      %193 = vset.pattern.permute.xlu0 3
      %194 = vperm.xlu0 %193, %v143
      %v195 = vpop.permute.xlu0 %194
      %v197 = vlaneseq
      %v198 = vshrl.u32 %v197, 7
      %v199 = vsub.s32 0, %v198
      %v200 = vrot.slane %v195, %v199
      %v201 = vmul.f32 %v182, %v200
      %v202 = vadd.f32 %v191, %v201
      %203 = vst [vmem:[#allocation8] sm:$0x1] %v202
    $region33: #{_forward.1} parent=1 // pred_fallthru
      _
    // Predicated region
    $region34: #{_forward.1} parent=1 // pred_check
      _
    $region35: #{_forward.1} parent=1 // pred_check_branch
      %205 = sbr.rel (0) target = $region37
    $region36: #{_forward.1} parent=1 // pred_region
      %s207 = ssub.s32 16, 16
      %208 = vsyncadd [#allocation4], %s207
      %s210 = sshll.u32 [#allocation3], 4
      %s211 = int_to_ptr.vmem [resolvable:$true] %s210
      %213 = dma.vmem_to_hbm [thread:$0]  %s211, 16, %s6, [#allocation4]
    $region37: #{_forward.1} parent=1 // pred_fallthru
      _
    // Predicated region
    $region38: #{_forward.1} parent=1 // pred_check
      _
    $region39: #{_forward.1} parent=1 // pred_check_branch
      %215 = sbr.rel (0) target = $region41
    $region40: #{_forward.1} parent=1 // pred_region
      %s217 = ssub.s32 16, 16
      %218 = vsyncadd [#allocation6], %s217
      %s220 = sshll.u32 [#allocation5], 4
      %s221 = int_to_ptr.vmem [resolvable:$true] %s220
      %223 = dma.vmem_to_hbm [thread:$0]  %s221, 16, %s7, [#allocation6]
    $region41: #{_forward.1} parent=1 // pred_fallthru
      _
    // Predicated region
    $region42: #{_forward.1} parent=1 // pred_check
      _
    $region43: #{_forward.1} parent=1 // pred_check_branch
      %225 = sbr.rel (0) target = $region45
    $region44: #{_forward.1} parent=1 // pred_region
      %s227 = ssub.s32 16, 16
      %228 = vsyncadd [#allocation6], %s227
      %s230 = sshll.u32 [#allocation7], 4
      %s231 = int_to_ptr.vmem [resolvable:$true] %s230
      %233 = dma.vmem_to_hbm [thread:$0]  %s231, 16, %s8, [#allocation6]
    $region45: #{_forward.1} parent=1 // pred_fallthru
      _
    // Predicated region
    $region46: #{_forward.1} parent=1 // pred_check
      _
    $region47: #{_forward.1} parent=1 // pred_check_branch
      %235 = sbr.rel (0) target = $region49
    $region48: #{_forward.1} parent=1 // pred_region
      %s237 = ssub.s32 16, 16
      %238 = vsyncadd [#allocation9], %s237
      %s240 = sshll.u32 [#allocation8], 4
      %s241 = int_to_ptr.vmem [resolvable:$true] %s240
      %243 = dma.vmem_to_hbm [thread:$0]  %s241, 16, %s9, [#allocation9]
    $region49: #{_forward.1} parent=1 // pred_fallthru
      _
    // Predicated region
    $region50: #{_forward.1} parent=1 // pred_check
      _
    $region51: #{_forward.1} parent=1 // pred_check_branch
      %245 = sbr.rel (0) target = $region53
    $region52: #{_forward.1} parent=1 // pred_region
      %246 = dma.done [#allocation4], 16
    $region53: #{_forward.1} parent=1 // pred_fallthru
      _
    // Predicated region
    $region54: #{_forward.1} parent=1 // pred_check
      _
    $region55: #{_forward.1} parent=1 // pred_check_branch
      %248 = sbr.rel (0) target = $region57
    $region56: #{_forward.1} parent=1 // pred_region
      %249 = dma.done [#allocation6], 16
    $region57: #{_forward.1} parent=1 // pred_fallthru
      _
    // Predicated region
    $region58: #{_forward.1} parent=1 // pred_check
      _
    $region59: #{_forward.1} parent=1 // pred_check_branch
      %251 = sbr.rel (0) target = $region61
    $region60: #{_forward.1} parent=1 // pred_region
      %252 = dma.done [#allocation6], 16
    $region61: #{_forward.1} parent=1 // pred_fallthru
      _
    // Predicated region
    $region62: #{_forward.1} parent=1 // pred_check
      _
    $region63: #{_forward.1} parent=1 // pred_check_branch
      %254 = sbr.rel (0) target = $region65
    $region64: #{_forward.1} parent=1 // pred_region
      %255 = dma.done [#allocation9], 16
    $region65: #{_forward.1} parent=1 // pred_fallthru
      _
    %256 = vsyncpa [#allocation4], 1
    %257 = vsyncpa [#allocation6], 1
    %258 = vsyncpa [#allocation9], 1

</llo_original>
